<compile_context>
chip_gen: v7x
topology: tpu7x:2x2x1
jax: 0.10.0
libtpu: 0.0.40
codegen_flags: <defaults>
</compile_context>

<pallas_src>
import jax
import jax.numpy as jnp
from jax import lax
from jax.experimental import pallas as pl
from jax.experimental.pallas import tpu as pltpu


# ---------------------------------------------------------------------------
# helpers
# ---------------------------------------------------------------------------
def _round_up(x, m):
    return ((x + m - 1) // m) * m


def _divisor_tile(dim, cap):
    """Largest multiple of 128 that divides `dim` (a multiple of 128), <= cap."""
    cap = max(128, cap)
    best = 128
    for t in range(128, min(dim, cap) + 1, 128):
        if dim % t == 0:
            best = t
    return best


def _vmem_limit(resident_bytes):
    """Scoped-VMEM limit sized to the real footprint (+margin), >= defaults."""
    return int(min(100 * 2**20, max(32 * 2**20, resident_bytes + 8 * 2**20)))


def _pad2(x, rows, cols, dtype):
    out = jnp.zeros((rows, cols), dtype)
    return out.at[: x.shape[0], : x.shape[1]].set(x.astype(dtype))


_W_PAIR_BUDGET = 24 * 2**20  # budget for a double-buffered weight tile pair


# ---------------------------------------------------------------------------
# Stage 1 kernel (prefix_projection=True): one-hot embedding gather on the MXU
# -> Linear1 -> tanh, producing h in bf16.  W1 is tiled over output columns;
# the gathered tokens live in a per-row-block scratch and are computed once
# (inner column axis j == 0) per row block.
# ---------------------------------------------------------------------------
def _embed_mlp1_kernel(ids_ref, table_ref, w1_ref, b1_ref, h_ref, tok_ref):
    j = pl.program_id(1)

    @pl.when(j == 0)
    def _():
        ids = ids_ref[...]                                   # (tm, 1) int32
        tm = ids.shape[0]
        p = table_ref.shape[0]
        iota = lax.broadcasted_iota(jnp.int32, (tm, p), 1)
        onehot = (ids == iota).astype(table_ref.dtype)       # exact 0/1 bf16
        tok = jnp.dot(onehot, table_ref[...],
                      preferred_element_type=jnp.float32)
        tok_ref[...] = tok.astype(tok_ref.dtype)             # exact (table is bf16)

    z = jnp.dot(tok_ref[...], w1_ref[...],
                preferred_element_type=jnp.float32) + b1_ref[...]
    h_ref[...] = jnp.tanh(z).astype(h_ref.dtype)             # bf16 h


def embed_mlp1_forward(ids_pad, table, w1, b1, *, tm, tk):
    m_pad = ids_pad.shape[0]
    p, hidden_p = table.shape
    grid = (m_pad // tm, hidden_p // tk)
    resident = (2 * tm * 4 + 2 * p * hidden_p * 2 + 2 * hidden_p * tk * 2
                + 2 * tk * 4 + 2 * tm * tk * 2 + tm * hidden_p * 2)
    return pl.pallas_call(
        _embed_mlp1_kernel,
        out_shape=jax.ShapeDtypeStruct((m_pad, hidden_p), jnp.bfloat16),
        grid_spec=pltpu.PrefetchScalarGridSpec(
            num_scalar_prefetch=0,
            grid=grid,
            in_specs=[
                pl.BlockSpec((tm, 1), lambda i, j: (i, 0)),         # ids
                pl.BlockSpec((p, hidden_p), lambda i, j: (0, 0)),   # table
                pl.BlockSpec((hidden_p, tk), lambda i, j: (0, j)),  # W1 col tile
                pl.BlockSpec((1, tk), lambda i, j: (0, j)),         # b1 tile
            ],
            out_specs=pl.BlockSpec((tm, tk), lambda i, j: (i, j)),
            scratch_shapes=[pltpu.VMEM((tm, hidden_p), jnp.bfloat16)],
        ),
        compiler_params=pltpu.CompilerParams(
            dimension_semantics=("parallel", "arbitrary"),
            vmem_limit_bytes=_vmem_limit(resident)),
    )(ids_pad, table, w1, b1)


# ---------------------------------------------------------------------------
# Stage 2 kernel: stream W2 over lane-dense out_dim tiles.  out_dim is the
# OUTER grid axis so each W2 tile is read exactly once; both axes are
# independent ("parallel") so megacore can split the stream.
# ---------------------------------------------------------------------------
def _w2_stream_kernel(h_ref, w2_ref, b2_ref, o_ref):
    y = jnp.dot(h_ref[...], w2_ref[...], preferred_element_type=jnp.float32)
    o_ref[...] = (y + b2_ref[...]).astype(o_ref.dtype)


def w2_stream_forward(h, w2, b2, *, tm, tn):
    m_pad, hidden_p = h.shape
    out_p = w2.shape[1]
    grid = (out_p // tn, m_pad // tm)      # out_dim OUTER, rows INNER
    resident = (2 * tm * hidden_p * 2 + 2 * hidden_p * tn * 2
                + 2 * tn * 4 + 2 * tm * tn * 4)
    cost = pl.CostEstimate(
        flops=2 * m_pad * hidden_p * out_p,
        transcendentals=0,
        bytes_accessed=(hidden_p * out_p * 2
                        + (out_p // tn) * m_pad * hidden_p * 2
                        + out_p * 4 + m_pad * out_p * 4))
    return pl.pallas_call(
        _w2_stream_kernel,
        out_shape=jax.ShapeDtypeStruct((m_pad, out_p), jnp.float32),
        grid_spec=pltpu.PrefetchScalarGridSpec(
            num_scalar_prefetch=0,
            grid=grid,
            in_specs=[
                pl.BlockSpec((tm, hidden_p), lambda i, j: (j, 0)),  # h rows
                pl.BlockSpec((hidden_p, tn), lambda i, j: (0, i)),  # W2 tile
                pl.BlockSpec((1, tn), lambda i, j: (0, i)),         # b2 tile
            ],
            out_specs=pl.BlockSpec((tm, tn), lambda i, j: (j, i)),
        ),
        compiler_params=pltpu.CompilerParams(
            dimension_semantics=("parallel", "parallel"),
            vmem_limit_bytes=_vmem_limit(resident)),
        cost_estimate=cost,
    )(h, w2, b2)


# ---------------------------------------------------------------------------
# No-projection branch: blocked row gather (exact copy) streamed over lane-
# dense out_dim tiles; out_dim outer so the table is read once total.
# ---------------------------------------------------------------------------
def _gather_kernel(ids_ref, table_ref, o_ref):
    ids = ids_ref[...]                                        # (tm, 1) int32
    tm = ids.shape[0]
    p = table_ref.shape[0]
    iota = lax.broadcasted_iota(jnp.int32, (tm, p), 1)
    onehot = (ids == iota).astype(jnp.float32)                # exact 0/1
    o_ref[...] = jnp.dot(onehot, table_ref[...],
                         preferred_element_type=jnp.float32).astype(o_ref.dtype)


def gather_forward(ids_pad, table, *, tm, tn):
    m_pad = ids_pad.shape[0]
    p, out_p = table.shape
    grid = (out_p // tn, m_pad // tm)      # out_dim OUTER, rows INNER
    resident = 2 * tm * 4 + 2 * p * tn * 4 + 2 * tm * tn * 4
    cost = pl.CostEstimate(
        flops=2 * m_pad * p * out_p,
        transcendentals=0,
        bytes_accessed=p * out_p * 4 + m_pad * out_p * 4)
    return pl.pallas_call(
        _gather_kernel,
        out_shape=jax.ShapeDtypeStruct((m_pad, out_p), table.dtype),
        grid_spec=pltpu.PrefetchScalarGridSpec(
            num_scalar_prefetch=0,
            grid=grid,
            in_specs=[
                pl.BlockSpec((tm, 1), lambda i, j: (j, 0)),
                pl.BlockSpec((p, tn), lambda i, j: (0, i)),
            ],
            out_specs=pl.BlockSpec((tm, tn), lambda i, j: (j, i)),
        ),
        compiler_params=pltpu.CompilerParams(
            dimension_semantics=("parallel", "parallel"),
            vmem_limit_bytes=_vmem_limit(resident)),
        cost_estimate=cost,
    )(ids_pad, table)


# ---------------------------------------------------------------------------
# JAX-side module mirroring the PyTorch PrefixEncoder.
# ---------------------------------------------------------------------------
class PrefixEncoder:
    def __init__(self, config, key):
        self.prefix_projection = config["prefix_projection"]
        hidden = config["hidden_size"]
        head_dim = hidden // config["num_attention_heads"]
        if config.get("num_key_value_heads") is not None:
            embed_size = config["num_key_value_heads"] * head_dim
        else:
            embed_size = hidden
        self.hidden = hidden
        self.out_dim = config["num_hidden_layers"] * embed_size * 2
        self.pre_seq_len = config["pre_seq_len"]

        hidden_p = _round_up(hidden, 128)
        self.hidden_p = hidden_p
        out128 = _round_up(self.out_dim, 128)
        self.out_p = out128

        k = jax.random.split(key, 5)
        if self.prefix_projection:
            emb = 0.02 * jax.random.normal(k[0], (self.pre_seq_len, hidden), jnp.float32)
            w1 = 0.02 * jax.random.normal(k[1], (hidden, hidden), jnp.float32)
            b1 = 0.01 * jax.random.normal(k[2], (hidden,), jnp.float32)
            w2 = 0.02 * jax.random.normal(k[3], (hidden, self.out_dim), jnp.float32)
            b2 = 0.01 * jax.random.normal(k[4], (self.out_dim,), jnp.float32)
            # Reference params = the bf16-quantized matmul weights (upcast),
            # biases f32 — the kernel's mixed-precision contract.
            self._ref = (emb.astype(jnp.bfloat16).astype(jnp.float32),
                         w1.astype(jnp.bfloat16).astype(jnp.float32), b1,
                         w2.astype(jnp.bfloat16).astype(jnp.float32), b2)

            # Tile choices (divide the padded dims -> no runtime padding),
            # capped so the double-buffered weight tile pair fits the budget.
            cap = max(128, (_W_PAIR_BUDGET // (4 * hidden_p)) // 128 * 128)
            self.tn = _divisor_tile(out128, min(2048, cap))
            self.tk1 = _divisor_tile(hidden_p, min(2048, cap))

            # Pad weights ONCE here (never inside forward).
            self.table_b = _pad2(emb, self.pre_seq_len, hidden_p, jnp.bfloat16)
            self.w1_b = _pad2(w1, hidden_p, hidden_p, jnp.bfloat16)
            self.b1_p = _pad2(b1.reshape(1, -1), 1, hidden_p, jnp.float32)
            self.w2_b = _pad2(w2, hidden_p, self.out_p, jnp.bfloat16)
            self.b2_p = _pad2(b2.reshape(1, -1), 1, self.out_p, jnp.float32)
        else:
            emb = 0.02 * jax.random.normal(
                k[0], (self.pre_seq_len, self.out_dim), jnp.float32)
            self._ref = (emb,)
            cap = max(128, ((16 * 2**20) // (8 * self.pre_seq_len)) // 128 * 128)
            self.tn_g = _divisor_tile(out128, min(2048, cap))
            self.table_p = _pad2(emb, self.pre_seq_len, self.out_p, jnp.float32)

        self._fwd = jax.jit(self._forward_impl)

    def _forward_impl(self, prefix):
        b, l = prefix.shape
        m = b * l
        # Row tile: multiple of 16 sublanes (bf16 packing), capped at 256
        # (v6e/v7x MXU rows).
        tm = min(256, _round_up(m, 16))
        m_pad = _round_up(m, tm)
        # Padded rows deliberately use id 0 (a valid table row) so there is
        # never an out-of-range gather; their outputs are sliced off below.
        ids_pad = jnp.zeros((m_pad, 1), jnp.int32).at[:m, 0].set(
            prefix.reshape(-1).astype(jnp.int32))

        if self.prefix_projection:
            h = embed_mlp1_forward(ids_pad, self.table_b, self.w1_b, self.b1_p,
                                   tm=tm, tk=self.tk1)
            out = w2_stream_forward(h, self.w2_b, self.b2_p, tm=tm, tn=self.tn)
        else:
            out = gather_forward(ids_pad, self.table_p, tm=tm, tn=self.tn_g)

        return out[:m, :self.out_dim].reshape(b, l, self.out_dim)

    def __call__(self, prefix):
        return self._fwd(prefix)

    # pure-JAX reference for validation
    def reference(self, prefix):
        if self.prefix_projection:
            emb, w1, b1, w2, b2 = self._ref
            tok = jnp.take(emb, prefix, axis=0)
            h = jnp.tanh(tok @ w1 + b1)
            return h @ w2 + b2
        (emb,) = self._ref
        return jnp.take(emb, prefix, axis=0)


if __name__ == "__main__":
    config = {
        "prefix_projection": True,
        "hidden_size": 32,
        "num_attention_heads": 4,
        "num_hidden_layers": 2,
        "num_key_value_heads": None,
        "pre_seq_len": 8,
    }
    key = jax.random.PRNGKey(0)
    kp, ki = jax.random.split(key)

    batch, prefix_len = 2, config["pre_seq_len"]
    prefix = jax.random.randint(ki, (batch, prefix_len), 0,
                                config["pre_seq_len"], dtype=jnp.int32)

    # projection branch: stage-1 (gather + Linear1 + tanh) kernel + W2 stream kernel
    enc = PrefixEncoder(config, kp)
    out = jax.block_until_ready(enc(prefix))
    ref = enc.reference(prefix)
    assert out.shape == (batch, prefix_len,
                         2 * config["num_hidden_layers"] * config["hidden_size"])
    assert jnp.allclose(out, ref, rtol=2e-2, atol=1e-3), \
        float(jnp.max(jnp.abs(out - ref)))

    # no-projection branch: blocked gather kernel (exact copy)
    config2 = dict(config, prefix_projection=False)
    enc2 = PrefixEncoder(config2, kp)
    out2 = jax.block_until_ready(enc2(prefix))
    ref2 = enc2.reference(prefix)
    assert out2.shape == ref2.shape
    assert jnp.allclose(out2, ref2, rtol=1e-4, atol=1e-6), \
        float(jnp.max(jnp.abs(out2 - ref2)))

    print("KERNEL_OK")
</pallas_src>

<mosaic_0001>
module attributes {stable_mosaic.version = 11 : i64} {
  func.func @_embed_mlp1_kernel(%arg0: i32, %arg1: i32, %arg2: memref<16x1xi32, #tpu.memory_space<vmem>>, %arg3: memref<8x128xbf16, #tpu.memory_space<vmem>>, %arg4: memref<128x128xbf16, #tpu.memory_space<vmem>>, %arg5: memref<1x128xf32, #tpu.memory_space<vmem>>, %arg6: memref<16x128xbf16, #tpu.memory_space<vmem>>, %arg7: memref<16x128xbf16, #tpu.memory_space<vmem>>) attributes {dimension_semantics = [#tpu.dimension_semantics<parallel>, #tpu.dimension_semantics<arbitrary>], iteration_bounds = array<i64: 1, 1>, scalar_prefetch = 0 : i64, scratch_operands = 1 : i64, tpu.core_type = #tpu.core_type<tc>, window_params = [{transform_indices = @transform_0, window_bounds = array<i64: 16, 1>}, {pipeline_mode = #tpu.pipeline_mode<synchronous>, transform_indices = @transform_1, window_bounds = array<i64: 8, 128>}, {transform_indices = @transform_2, window_bounds = array<i64: 128, 128>}, {transform_indices = @transform_3, window_bounds = array<i64: 1, 128>}, {transform_indices = @transform_4, window_bounds = array<i64: 16, 128>}]} {
    %c0_i32 = arith.constant 0 : i32
    %0 = arith.cmpi eq, %arg1, %c0_i32 : i32
    %1 = arith.extui %0 : i1 to i32
    %c0_i32_0 = arith.constant 0 : i32
    %2 = arith.cmpi ne, %1, %c0_i32_0 : i32
    scf.if %2 {
      %c0_8 = arith.constant 0 : index
      %c0_9 = arith.constant 0 : index
      %12 = vector.load %arg2[%c0_8, %c0_9] : memref<16x1xi32, #tpu.memory_space<vmem>>, vector<16x1xi32>
      %13 = tpu.iota {dimensions = array<i32: 1>} : vector<16x8xi32>
      %14 = vector.broadcast %12 : vector<16x1xi32> to vector<16x8xi32>
      %15 = arith.cmpi eq, %14, %13 : vector<16x8xi32>
      %16 = arith.extui %15 : vector<16x8xi1> to vector<16x8xi32>
      %17 = arith.sitofp %16 : vector<16x8xi32> to vector<16x8xf32>
      %18 = arith.truncf %17 : vector<16x8xf32> to vector<16x8xbf16>
      %c0_10 = arith.constant 0 : index
      %c0_11 = arith.constant 0 : index
      %19 = vector.load %arg3[%c0_10, %c0_11] : memref<8x128xbf16, #tpu.memory_space<vmem>>, vector<8x128xbf16>
      %cst_12 = arith.constant dense<0.000000e+00> : vector<16x128xf32>
      %20 = tpu.matmul %18, %19, %cst_12 {dimension_numbers = #tpu.dot_dimension_numbers<[1], [0], [0], [1], [0, 0, 1, 1], [], []>} : vector<16x8xbf16>, vector<8x128xbf16>, vector<16x128xf32> -> vector<16x128xf32>
      %21 = arith.truncf %20 : vector<16x128xf32> to vector<16x128xbf16>
      %c0_13 = arith.constant 0 : index
      %c0_14 = arith.constant 0 : index
      %22 = vector.load %arg7[%c0_13, %c0_14] : memref<16x128xbf16, #tpu.memory_space<vmem>>, vector<16x128xbf16>
      tpu.vector_store %arg7[%c0_13, %c0_14], %21 {strides = array<i32>} : memref<16x128xbf16, #tpu.memory_space<vmem>>, vector<16x128xbf16>,
    } else {
    }
    %c0 = arith.constant 0 : index
    %c0_1 = arith.constant 0 : index
    %3 = vector.load %arg7[%c0, %c0_1] : memref<16x128xbf16, #tpu.memory_space<vmem>>, vector<16x128xbf16>
    %c0_2 = arith.constant 0 : index
    %c0_3 = arith.constant 0 : index
    %4 = vector.load %arg4[%c0_2, %c0_3] : memref<128x128xbf16, #tpu.memory_space<vmem>>, vector<128x128xbf16>
    %cst = arith.constant dense<0.000000e+00> : vector<16x128xf32>
    %5 = tpu.matmul %3, %4, %cst {dimension_numbers = #tpu.dot_dimension_numbers<[1], [0], [0], [1], [0, 0, 1, 1], [], []>} : vector<16x128xbf16>, vector<128x128xbf16>, vector<16x128xf32> -> vector<16x128xf32>
    %c0_4 = arith.constant 0 : index
    %c0_5 = arith.constant 0 : index
    %6 = vector.load %arg5[%c0_4, %c0_5] : memref<1x128xf32, #tpu.memory_space<vmem>>, vector<1x128xf32>
    %7 = vector.broadcast %6 : vector<1x128xf32> to vector<16x128xf32>
    %8 = arith.addf %5, %7 : vector<16x128xf32>
    %9 = math.tanh %8 : vector<16x128xf32>
    %10 = arith.truncf %9 : vector<16x128xf32> to vector<16x128xbf16>
    %c0_6 = arith.constant 0 : index
    %c0_7 = arith.constant 0 : index
    %11 = vector.load %arg6[%c0_6, %c0_7] : memref<16x128xbf16, #tpu.memory_space<vmem>>, vector<16x128xbf16>
    tpu.vector_store %arg6[%c0_6, %c0_7], %10 {strides = array<i32>} : memref<16x128xbf16, #tpu.memory_space<vmem>>, vector<16x128xbf16>,
    return
  }
  func.func @transform_0(%arg0: i32, %arg1: i32) -> (i32, i32) {
    %c0_i32 = arith.constant 0 : i32
    %c0_i32_0 = arith.constant 0 : i32
    return %arg0, %c0_i32 : i32, i32
  }
  func.func @transform_1(%arg0: i32, %arg1: i32) -> (i32, i32) {
    %c0_i32 = arith.constant 0 : i32
    %c0_i32_0 = arith.constant 0 : i32
    %c0_i32_1 = arith.constant 0 : i32
    return %c0_i32, %c0_i32_0 : i32, i32
  }
  func.func @transform_2(%arg0: i32, %arg1: i32) -> (i32, i32) {
    %c0_i32 = arith.constant 0 : i32
    %c0_i32_0 = arith.constant 0 : i32
    return %c0_i32, %arg1 : i32, i32
  }
  func.func @transform_3(%arg0: i32, %arg1: i32) -> (i32, i32) {
    %c0_i32 = arith.constant 0 : i32
    %c0_i32_0 = arith.constant 0 : i32
    return %c0_i32, %arg1 : i32, i32
  }
  func.func @transform_4(%arg0: i32, %arg1: i32) -> (i32, i32) {
    %c0_i32 = arith.constant 0 : i32
    return %arg0, %arg1 : i32, i32
  }
}

module attributes {stable_mosaic.version = 11 : i64} {
  func.func @_w2_stream_kernel(%arg0: i32, %arg1: i32, %arg2: memref<16x128xbf16, #tpu.memory_space<vmem>>, %arg3: memref<128x128xbf16, #tpu.memory_space<vmem>>, %arg4: memref<1x128xf32, #tpu.memory_space<vmem>>, %arg5: memref<16x128xf32, #tpu.memory_space<vmem>>) attributes {dimension_semantics = [#tpu.dimension_semantics<parallel>, #tpu.dimension_semantics<parallel>], iteration_bounds = array<i64: 1, 1>, scalar_prefetch = 0 : i64, scratch_operands = 0 : i64, tpu.core_type = #tpu.core_type<tc>, window_params = [{transform_indices = @transform_0, window_bounds = array<i64: 16, 128>}, {transform_indices = @transform_1, window_bounds = array<i64: 128, 128>}, {transform_indices = @transform_2, window_bounds = array<i64: 1, 128>}, {transform_indices = @transform_3, window_bounds = array<i64: 16, 128>}]} {
    %c0 = arith.constant 0 : index
    %c0_0 = arith.constant 0 : index
    %0 = vector.load %arg2[%c0, %c0_0] : memref<16x128xbf16, #tpu.memory_space<vmem>>, vector<16x128xbf16>
    %c0_1 = arith.constant 0 : index
    %c0_2 = arith.constant 0 : index
    %1 = vector.load %arg3[%c0_1, %c0_2] : memref<128x128xbf16, #tpu.memory_space<vmem>>, vector<128x128xbf16>
    %cst = arith.constant dense<0.000000e+00> : vector<16x128xf32>
    %2 = tpu.matmul %0, %1, %cst {dimension_numbers = #tpu.dot_dimension_numbers<[1], [0], [0], [1], [0, 0, 1, 1], [], []>} : vector<16x128xbf16>, vector<128x128xbf16>, vector<16x128xf32> -> vector<16x128xf32>
    %c0_3 = arith.constant 0 : index
    %c0_4 = arith.constant 0 : index
    %3 = vector.load %arg4[%c0_3, %c0_4] : memref<1x128xf32, #tpu.memory_space<vmem>>, vector<1x128xf32>
    %4 = vector.broadcast %3 : vector<1x128xf32> to vector<16x128xf32>
    %5 = arith.addf %2, %4 : vector<16x128xf32>
    %c0_5 = arith.constant 0 : index
    %c0_6 = arith.constant 0 : index
    %6 = vector.load %arg5[%c0_5, %c0_6] : memref<16x128xf32, #tpu.memory_space<vmem>>, vector<16x128xf32>
    tpu.vector_store %arg5[%c0_5, %c0_6], %5 {strides = array<i32>} : memref<16x128xf32, #tpu.memory_space<vmem>>, vector<16x128xf32>,
    return
  }
  func.func @transform_0(%arg0: i32, %arg1: i32) -> (i32, i32) {
    %c0_i32 = arith.constant 0 : i32
    %c0_i32_0 = arith.constant 0 : i32
    return %arg1, %c0_i32 : i32, i32
  }
  func.func @transform_1(%arg0: i32, %arg1: i32) -> (i32, i32) {
    %c0_i32 = arith.constant 0 : i32
    %c0_i32_0 = arith.constant 0 : i32
    return %c0_i32, %arg0 : i32, i32
  }
  func.func @transform_2(%arg0: i32, %arg1: i32) -> (i32, i32) {
    %c0_i32 = arith.constant 0 : i32
    %c0_i32_0 = arith.constant 0 : i32
    return %c0_i32, %arg0 : i32, i32
  }
  func.func @transform_3(%arg0: i32, %arg1: i32) -> (i32, i32) {
    %c0_i32 = arith.constant 0 : i32
    return %arg1, %arg0 : i32, i32
  }
}

</mosaic_0001>

<llo_original>
// kernel: _forward_impl.3
$region0: #{_forward_impl.3}
  #allocation0 [shape = 'u32[]', space=smem, size = 0x4, offset = 0x4, fixed_abs, tag = 'smem constant byte address 0x4 - core index']
  #allocation1 [shape = 'u32[144,128]{1,0:T(1,128)}', space=vmem, size = 0x12000, scoped, tag = 'internal scratch']
  %s0 = inlined_call_operand.vmem [shape: bf16[16,128], index: 0, kind: input, shape index: {}]
  %s1 = inlined_call_operand.vmem [shape: bf16[128,128], index: 1, kind: input, shape index: {}]
  %s2 = inlined_call_operand.vmem [shape: f32[1,128], index: 2, kind: input, shape index: {}]
  %s3 = inlined_call_operand.hbm [shape: f32[16,128], index: 3, kind: output, shape index: {}]
  %s4 = sld [smem:[#allocation0]]
  $region22: #{_forward_impl.3} parent=0
    _
  %s6 = ssub.s32 1, %s4
  %s7 = scalar_select 0, %s6, %s4
  $region1: #{_forward_impl.3} parent=0
    #allocation2 [shape = 'u8[8192]{0}', space=vmem, size = 0x2000, scoped, tag = 'output window, operand 0, single buffered']
    #allocation3 [shape = 's32[1]{0}', space=sflag, size = 0x4, scoped, tag = 'scoped memory for _forward_impl.3']
    %8 = vsyncpa [#allocation3], 0
    // Predicated region
    $region2: #{_forward_impl.3} parent=1 // pred_check
      _
    $region3: #{_forward_impl.3} parent=1 // pred_check_branch
      %10 = sbr.rel (0) target = $region5
    $region4: #{_forward_impl.3} parent=1 // pred_region
      _
    $region5: #{_forward_impl.3} parent=1 // pred_fallthru
      _
    // Predicated region
    $region6: #{_forward_impl.3} parent=1 // pred_check
      _
    $region7: #{_forward_impl.3} parent=1 // pred_check_branch
      %12 = sbr.rel (0) target = $region9
    $region8: #{_forward_impl.3} parent=1 // pred_region
      _
    $region9: #{_forward_impl.3} parent=1 // pred_fallthru
      _
    // Predicated region
    $region10: #{_forward_impl.3} parent=1 // pred_check
      _
    $region11: #{_forward_impl.3} parent=1 // pred_check_branch
      %14 = sbr.rel (0) target = $region13
    $region12: #{_forward_impl.3} parent=1 // pred_region
      _
    $region13: #{_forward_impl.3} parent=1 // pred_fallthru
      _
    %v16 = vld [vmem:[%s0] sm:$0xf]
    %v17 = vld [vmem:[%s0 + $0x4] sm:$0xf]
    %v18 = vld [vmem:[%s1] sm:$0xf]
    %v19 = vld [vmem:[%s1 + $0x4] sm:$0xf]
    %v20 = vld [vmem:[%s1 + $0x8] sm:$0xf]
    %v21 = vld [vmem:[%s1 + $0xc] sm:$0xf]
    %v22 = vld [vmem:[%s1 + $0x10] sm:$0xf]
    %v23 = vld [vmem:[%s1 + $0x14] sm:$0xf]
    %v24 = vld [vmem:[%s1 + $0x18] sm:$0xf]
    %v25 = vld [vmem:[%s1 + $0x1c] sm:$0xf]
    %v26 = vld [vmem:[%s1 + $0x20] sm:$0xf]
    %v27 = vld [vmem:[%s1 + $0x24] sm:$0xf]
    %v28 = vld [vmem:[%s1 + $0x28] sm:$0xf]
    %v29 = vld [vmem:[%s1 + $0x2c] sm:$0xf]
    %v30 = vld [vmem:[%s1 + $0x30] sm:$0xf]
    %v31 = vld [vmem:[%s1 + $0x34] sm:$0xf]
    %v32 = vld [vmem:[%s1 + $0x38] sm:$0xf]
    %v33 = vld [vmem:[%s1 + $0x3c] sm:$0xf]
    %v34 = vld [vmem:[%s2] sm:$0x1]
    %v36 = vlaneseq
    %v37 = vshrl.u32 %v36, 7
    %v38 = vsub.s32 0, %v37
    %v39 = vrot.slane %v34, %v38
    %v43 = vunpack.c.l.b16 %v16
    %v44 = vunpack.c.l.b16 %v17
    %v45 = vpack.c.b16 %v44, %v43
    %v63 = vunpack.c.l.b16 %v18
    %v64 = vunpack.c.l.b16 %v19
    %v65 = vunpack.c.l.b16 %v20
    %v66 = vunpack.c.l.b16 %v21
    %v67 = vunpack.c.l.b16 %v22
    %v68 = vunpack.c.l.b16 %v23
    %v69 = vunpack.c.l.b16 %v24
    %v70 = vunpack.c.l.b16 %v25
    %v71 = vunpack.c.l.b16 %v26
    %v72 = vunpack.c.l.b16 %v27
    %v73 = vunpack.c.l.b16 %v28
    %v74 = vunpack.c.l.b16 %v29
    %v75 = vunpack.c.l.b16 %v30
    %v76 = vunpack.c.l.b16 %v31
    %v77 = vunpack.c.l.b16 %v32
    %v78 = vunpack.c.l.b16 %v33
    %v79 = vpack.c.b16 %v64, %v63
    %v80 = vpack.c.b16 %v66, %v65
    %v81 = vpack.c.b16 %v68, %v67
    %v82 = vpack.c.b16 %v70, %v69
    %v83 = vpack.c.b16 %v72, %v71
    %v84 = vpack.c.b16 %v74, %v73
    %v85 = vpack.c.b16 %v76, %v75
    %v86 = vpack.c.b16 %v78, %v77
    %95 = vmatprep.subr.bf16.mxu0 0
    %96 = vmatpush1.bf16.msra.mxu0 %v79
    %97 = vmatprep.subr.bf16.mxu0 0
    %98 = vmatpush1.bf16.msra.mxu0 %v80
    %99 = vmatprep.subr.bf16.mxu0 0
    %100 = vmatpush1.bf16.msra.mxu0 %v81
    %101 = vmatprep.subr.bf16.mxu0 0
    %102 = vmatpush1.bf16.msra.mxu0 %v82
    %103 = vmatprep.subr.bf16.mxu0 0
    %104 = vmatpush1.bf16.msra.mxu0 %v83
    %105 = vmatprep.subr.bf16.mxu0 0
    %106 = vmatpush1.bf16.msra.mxu0 %v84
    %107 = vmatprep.subr.bf16.mxu0 0
    %108 = vmatpush1.bf16.msra.mxu0 %v85
    %109 = vmatprep.subr.bf16.mxu0 0
    %110 = vmatpush1.bf16.msra.mxu0 %v86
    %111 = vmatprep.subr.bf16.mxu0 0
    %112 = vmatpush1.bf16.msra.mxu0 0
    %113 = vmatprep.subr.bf16.mxu0 0
    %114 = vmatpush1.bf16.msra.mxu0 0
    %115 = vmatprep.subr.bf16.mxu0 0
    %116 = vmatpush1.bf16.msra.mxu0 0
    %117 = vmatprep.subr.bf16.mxu0 0
    %118 = vmatpush1.bf16.msra.mxu0 0
    %119 = vmatprep.subr.bf16.mxu0 0
    %120 = vmatpush1.bf16.msra.mxu0 0
    %121 = vmatprep.subr.bf16.mxu0 0
    %122 = vmatpush1.bf16.msra.mxu0 0
    %123 = vmatprep.subr.bf16.mxu0 0
    %124 = vmatpush1.bf16.msra.mxu0 0
    %125 = vmatprep.subr.bf16.mxu0 0
    %126 = vmatpush1.bf16.msra.mxu0 0
    %127 = vmatprep.mubr.bf16.mxu0 0
    %128 = vmatmul.mubr.bf16.gmra.mrb[0].mxu0 %v45
    %v129 = vpop.f32.mrb[0].mxu0
    %v130 = vadd.f32 %v39, %v129
    %v131 = vpop.f32.mrb[0].mxu0
    %v132 = vpop.f32.mrb[0].mxu0
    %v133 = vadd.f32 %v39, %v132
    %v134 = vpop.f32.mrb[0].mxu0
    %135 = vdwg.mxu0
    %136 = vst [vmem:[#allocation2] sm:$0xff] %v130
    %137 = vst [vmem:[#allocation2 + $0x8] sm:$0xff] %v133
    // Predicated region
    $region14: #{_forward_impl.3} parent=1 // pred_check
      _
    $region15: #{_forward_impl.3} parent=1 // pred_check_branch
      %139 = sbr.rel (0) target = $region17
    $region16: #{_forward_impl.3} parent=1 // pred_region
      %s141 = ssub.s32 256, 256
      %142 = vsyncadd [#allocation3], %s141
      %s143 = sshll.u32 [#allocation2], 4
      %s144 = int_to_ptr.vmem [resolvable:$true] %s143
      %149 = dma.vmem_to_hbm [thread:$0]  %s144, 256, %s3, [#allocation3], 128, 128, 8
    $region17: #{_forward_impl.3} parent=1 // pred_fallthru
      _
    // Predicated region
    $region18: #{_forward_impl.3} parent=1 // pred_check
      _
    $region19: #{_forward_impl.3} parent=1 // pred_check_branch
      %151 = sbr.rel (0) target = $region21
    $region20: #{_forward_impl.3} parent=1 // pred_region
      %152 = dma.done [#allocation3], 256
    $region21: #{_forward_impl.3} parent=1 // pred_fallthru
      _
    %153 = vsyncpa [#allocation3], 1

// kernel: _forward_impl.2
$region0: #{_forward_impl.2}
  #allocation0 [shape = 'u32[]', space=smem, size = 0x4, offset = 0x4, fixed_abs, tag = 'smem constant byte address 0x4 - core index']
  #allocation1 [shape = 'u32[144,128]{1,0:T(1,128)}', space=vmem, size = 0x12000, scoped, tag = 'internal scratch']
  #allocation2 [shape = 'bf16[16,128]{1,0:T(16,128)(2,1)}', space=vmem, size = 0x1000, scoped, tag = 'scratch operand']
  %s0 = inlined_call_operand.vmem [shape: s32[16,1], index: 0, kind: input, shape index: {}]
  %s1 = inlined_call_operand.hbm [shape: bf16[8,128], index: 1, kind: input, shape index: {}]
  %s2 = inlined_call_operand.hbm [shape: bf16[128,128], index: 2, kind: input, shape index: {}]
  %s3 = inlined_call_operand.vmem [shape: f32[1,128], index: 3, kind: input, shape index: {}]
  %s4 = inlined_call_operand.vmem [shape: bf16[16,128], index: 4, kind: output, shape index: {}]
  %s5 = sld [smem:[#allocation0]]
  $region38: #{_forward_impl.2} parent=0
    _
  %s7 = ssub.s32 1, %s5
  %s8 = scalar_select 0, %s7, %s5
  $region1: #{_forward_impl.2} parent=0
    #allocation3 [shape = 'u8[2048]{0}', space=vmem, size = 0x800, scoped, tag = 'input window, operand 1, single buffered']
    #allocation4 [shape = 's32[1]{0}', space=sflag, size = 0x4, scoped, tag = 'scoped memory for _forward_impl.2']
    #allocation5 [shape = 'u8[32768]{0}', space=vmem, size = 0x8000, scoped, tag = 'input window, operand 2, single buffered']
    #allocation6 [shape = 's32[1]{0}', space=sflag, size = 0x4, scoped, tag = 'scoped memory for _forward_impl.2']
    %9 = vsyncpa [#allocation4], 0
    %10 = vsyncpa [#allocation6], 0
    // Predicated region
    $region2: #{_forward_impl.2} parent=1 // pred_check
      _
    $region3: #{_forward_impl.2} parent=1 // pred_check_branch
      %12 = sbr.rel (0) target = $region5
    $region4: #{_forward_impl.2} parent=1 // pred_region
      _
    $region5: #{_forward_impl.2} parent=1 // pred_fallthru
      _
    // Predicated region
    $region6: #{_forward_impl.2} parent=1 // pred_check
      _
    $region7: #{_forward_impl.2} parent=1 // pred_check_branch
      %14 = sbr.rel (0) target = $region9
    $region8: #{_forward_impl.2} parent=1 // pred_region
      %s16 = ssub.s32 64, 64
      %17 = vsyncadd [#allocation4], %s16
      %s19 = sshll.u32 [#allocation3], 4
      %s20 = int_to_ptr.vmem [resolvable:$true] %s19
      %22 = dma.hbm_to_vmem [thread:$0]  %s1, 64, %s20, [#allocation4]
    $region9: #{_forward_impl.2} parent=1 // pred_fallthru
      _
    // Predicated region
    $region10: #{_forward_impl.2} parent=1 // pred_check
      _
    $region11: #{_forward_impl.2} parent=1 // pred_check_branch
      %24 = sbr.rel (0) target = $region13
    $region12: #{_forward_impl.2} parent=1 // pred_region
      %s26 = ssub.s32 1024, 1024
      %27 = vsyncadd [#allocation6], %s26
      %s28 = sshll.u32 [#allocation5], 4
      %s29 = int_to_ptr.vmem [resolvable:$true] %s28
      %34 = dma.hbm_to_vmem [thread:$0]  %s2, 1024, %s29, [#allocation6], 64, 64, 4
    $region13: #{_forward_impl.2} parent=1 // pred_fallthru
      _
    // Predicated region
    $region14: #{_forward_impl.2} parent=1 // pred_check
      _
    $region15: #{_forward_impl.2} parent=1 // pred_check_branch
      %36 = sbr.rel (0) target = $region17
    $region16: #{_forward_impl.2} parent=1 // pred_region
      _
    $region17: #{_forward_impl.2} parent=1 // pred_fallthru
      _
    // Predicated region
    $region18: #{_forward_impl.2} parent=1 // pred_check
      _
    $region19: #{_forward_impl.2} parent=1 // pred_check_branch
      %38 = sbr.rel (0) target = $region21
    $region20: #{_forward_impl.2} parent=1 // pred_region
      %39 = dma.done [#allocation4], 64
    $region21: #{_forward_impl.2} parent=1 // pred_fallthru
      _
    // Predicated region
    $region22: #{_forward_impl.2} parent=1 // pred_check
      _
    $region23: #{_forward_impl.2} parent=1 // pred_check_branch
      %41 = sbr.rel (0) target = $region25
    $region24: #{_forward_impl.2} parent=1 // pred_region
      %42 = dma.done [#allocation6], 1024
    $region25: #{_forward_impl.2} parent=1 // pred_fallthru
      _
    %p44 = scmp.eq.s32.totalorder 0, 0
    // Predicated region
    $region26: #{_forward_impl.2} parent=1 // pred_check
      %p45 = pneg %p44
    $region27: #{_forward_impl.2} parent=1 // pred_check_branch
      %47 = sbr.rel (%p45) target = $region29
    $region28: #{_forward_impl.2} parent=1 // pred_region
      %v48 = vld [vmem:[%s0] sm:$0xff]
      %v49 = vld [vmem:[%s0 + $0x8] sm:$0xff]
      %v50 = vlaneseq
      %v51 = vand.u32 %v50, 127
      %52 = vset.pattern.permute.xlu0 0
      %53 = vperm.xlu0 %52, %v48
      %v54 = vpop.permute.xlu0 %53
      %55 = vset.pattern.permute.xlu0 0
      %56 = vperm.xlu0 %55, %v49
      %v57 = vpop.permute.xlu0 %56
      %vm58 = vcmp.eq.s32.totalorder %v54, %v51
      %vm59 = vcmp.eq.s32.totalorder %v57, %v51
      %v60 = vsel %vm58, 1, 0
      %v61 = vsel %vm59, 1, 0
      %v62 = vcvt.s32.f32 %v60
      %v63 = vcvt.s32.f32 %v61
      %v64 = vpack.c.bf16 %v63, %v62
      %v65 = vld [vmem:[#allocation3] sm:$0xf]
      %vm66 = vcmask 64512
      %v68 = vsel %vm66, %v64, 0
      %vm70 = vcmask 1043456
      %v72 = vsel %vm70, %v65, 0
      %74 = vmatprep.subr.bf16.mxu0 0
      %75 = vmatpush1.bf16.msra.mxu0 %v72
      %76 = vmatprep.subr.bf16.mxu0 0
      %77 = vmatpush1.bf16.msra.mxu0 0
      %78 = vmatprep.subr.bf16.mxu0 0
      %79 = vmatpush1.bf16.msra.mxu0 0
      %80 = vmatprep.subr.bf16.mxu0 0
      %81 = vmatpush1.bf16.msra.mxu0 0
      %82 = vmatprep.subr.bf16.mxu0 0
      %83 = vmatpush1.bf16.msra.mxu0 0
      %84 = vmatprep.subr.bf16.mxu0 0
      %85 = vmatpush1.bf16.msra.mxu0 0
      %86 = vmatprep.subr.bf16.mxu0 0
      %87 = vmatpush1.bf16.msra.mxu0 0
      %88 = vmatprep.subr.bf16.mxu0 0
      %89 = vmatpush1.bf16.msra.mxu0 0
      %90 = vmatprep.subr.bf16.mxu0 0
      %91 = vmatpush1.bf16.msra.mxu0 0
      %92 = vmatprep.subr.bf16.mxu0 0
      %93 = vmatpush1.bf16.msra.mxu0 0
      %94 = vmatprep.subr.bf16.mxu0 0
      %95 = vmatpush1.bf16.msra.mxu0 0
      %96 = vmatprep.subr.bf16.mxu0 0
      %97 = vmatpush1.bf16.msra.mxu0 0
      %98 = vmatprep.subr.bf16.mxu0 0
      %99 = vmatpush1.bf16.msra.mxu0 0
      %100 = vmatprep.subr.bf16.mxu0 0
      %101 = vmatpush1.bf16.msra.mxu0 0
      %102 = vmatprep.subr.bf16.mxu0 0
      %103 = vmatpush1.bf16.msra.mxu0 0
      %104 = vmatprep.subr.bf16.mxu0 0
      %105 = vmatpush1.bf16.msra.mxu0 0
      %106 = vmatprep.mubr.bf16.mxu0 0
      %107 = vmatmul.mubr.bf16.gmra.mrb[0].mxu0 %v68
      %v108 = vpop.f32.mrb[0].mxu0
      %v109 = vadd.f32 0.0, %v108
      %v110 = vpop.f32.mrb[0].mxu0
      %v111 = vpop.f32.mrb[0].mxu0
      %v112 = vadd.f32 0.0, %v111
      %v113 = vpop.f32.mrb[0].mxu0
      %114 = vdwg.mxu0
      %v115 = vpack.c.bf16 %v112, %v109
      %116 = vst [vmem:[#allocation2] sm:$0xff] %v115
    $region29: #{_forward_impl.2} parent=1 // pred_fallthru
      _
    %v117 = vld [vmem:[#allocation2] sm:$0xff]
    %v118 = vld [vmem:[#allocation5] sm:$0xf]
    %v119 = vld [vmem:[#allocation5 + $0x4] sm:$0xf]
    %v120 = vld [vmem:[#allocation5 + $0x8] sm:$0xf]
    %v121 = vld [vmem:[#allocation5 + $0xc] sm:$0xf]
    %v122 = vld [vmem:[#allocation5 + $0x10] sm:$0xf]
    %v123 = vld [vmem:[#allocation5 + $0x14] sm:$0xf]
    %v124 = vld [vmem:[#allocation5 + $0x18] sm:$0xf]
    %v125 = vld [vmem:[#allocation5 + $0x1c] sm:$0xf]
    %v126 = vld [vmem:[#allocation5 + $0x20] sm:$0xf]
    %v127 = vld [vmem:[#allocation5 + $0x24] sm:$0xf]
    %v128 = vld [vmem:[#allocation5 + $0x28] sm:$0xf]
    %v129 = vld [vmem:[#allocation5 + $0x2c] sm:$0xf]
    %v130 = vld [vmem:[#allocation5 + $0x30] sm:$0xf]
    %v131 = vld [vmem:[#allocation5 + $0x34] sm:$0xf]
    %v132 = vld [vmem:[#allocation5 + $0x38] sm:$0xf]
    %v133 = vld [vmem:[#allocation5 + $0x3c] sm:$0xf]
    %v134 = vld [vmem:[%s3] sm:$0x1]
    %v136 = vlaneseq
    %v137 = vshrl.u32 %v136, 7
    %v138 = vsub.s32 0, %v137
    %v139 = vrot.slane %v134, %v138
    %v157 = vunpack.c.l.b16 %v118
    %v158 = vunpack.c.l.b16 %v119
    %v159 = vunpack.c.l.b16 %v120
    %v160 = vunpack.c.l.b16 %v121
    %v161 = vunpack.c.l.b16 %v122
    %v162 = vunpack.c.l.b16 %v123
    %v163 = vunpack.c.l.b16 %v124
    %v164 = vunpack.c.l.b16 %v125
    %v165 = vunpack.c.l.b16 %v126
    %v166 = vunpack.c.l.b16 %v127
    %v167 = vunpack.c.l.b16 %v128
    %v168 = vunpack.c.l.b16 %v129
    %v169 = vunpack.c.l.b16 %v130
    %v170 = vunpack.c.l.b16 %v131
    %v171 = vunpack.c.l.b16 %v132
    %v172 = vunpack.c.l.b16 %v133
    %v173 = vpack.c.b16 %v158, %v157
    %v174 = vpack.c.b16 %v160, %v159
    %v175 = vpack.c.b16 %v162, %v161
    %v176 = vpack.c.b16 %v164, %v163
    %v177 = vpack.c.b16 %v166, %v165
    %v178 = vpack.c.b16 %v168, %v167
    %v179 = vpack.c.b16 %v170, %v169
    %v180 = vpack.c.b16 %v172, %v171
    %189 = vmatprep.subr.bf16.mxu0 0
    %190 = vmatpush1.bf16.msra.mxu0 %v173
    %191 = vmatprep.subr.bf16.mxu0 0
    %192 = vmatpush1.bf16.msra.mxu0 %v174
    %193 = vmatprep.subr.bf16.mxu0 0
    %194 = vmatpush1.bf16.msra.mxu0 %v175
    %195 = vmatprep.subr.bf16.mxu0 0
    %196 = vmatpush1.bf16.msra.mxu0 %v176
    %197 = vmatprep.subr.bf16.mxu0 0
    %198 = vmatpush1.bf16.msra.mxu0 %v177
    %199 = vmatprep.subr.bf16.mxu0 0
    %200 = vmatpush1.bf16.msra.mxu0 %v178
    %201 = vmatprep.subr.bf16.mxu0 0
    %202 = vmatpush1.bf16.msra.mxu0 %v179
    %203 = vmatprep.subr.bf16.mxu0 0
    %204 = vmatpush1.bf16.msra.mxu0 %v180
    %205 = vmatprep.subr.bf16.mxu0 0
    %206 = vmatpush1.bf16.msra.mxu0 0
    %207 = vmatprep.subr.bf16.mxu0 0
    %208 = vmatpush1.bf16.msra.mxu0 0
    %209 = vmatprep.subr.bf16.mxu0 0
    %210 = vmatpush1.bf16.msra.mxu0 0
    %211 = vmatprep.subr.bf16.mxu0 0
    %212 = vmatpush1.bf16.msra.mxu0 0
    %213 = vmatprep.subr.bf16.mxu0 0
    %214 = vmatpush1.bf16.msra.mxu0 0
    %215 = vmatprep.subr.bf16.mxu0 0
    %216 = vmatpush1.bf16.msra.mxu0 0
    %217 = vmatprep.subr.bf16.mxu0 0
    %218 = vmatpush1.bf16.msra.mxu0 0
    %219 = vmatprep.subr.bf16.mxu0 0
    %220 = vmatpush1.bf16.msra.mxu0 0
    %221 = vmatprep.mubr.bf16.mxu0 0
    %222 = vmatmul.mubr.bf16.gmra.mrb[0].mxu0 %v117
    %v223 = vpop.f32.mrb[0].mxu0
    %v224 = vadd.f32 %v139, %v223
    %v225 = vpop.f32.mrb[0].mxu0
    %v226 = vpop.f32.mrb[0].mxu0
    %v227 = vadd.f32 %v139, %v226
    %v228 = vpop.f32.mrb[0].mxu0
    %229 = vdwg.mxu0
    %v230 = vtanh.pop %v224
    %v231 = vtanh.pop %v227
    %v232 = vpack.c.bf16 %v231, %v230
    %v234 = vunpack.c.l.b16 %v232
    %v235 = vunpack.c.h.b16 %v232
    %v236 = vpack.c.b16 %v234, %v234
    %v237 = vpack.c.b16 %v235, %v235
    %240 = vst [vmem:[%s4] sm:$0xf] %v236
    %241 = vst [vmem:[%s4 + $0x4] sm:$0xf] %v237
    // Predicated region
    $region30: #{_forward_impl.2} parent=1 // pred_check
      _
    $region31: #{_forward_impl.2} parent=1 // pred_check_branch
      %243 = sbr.rel (0) target = $region33
    $region32: #{_forward_impl.2} parent=1 // pred_region
      _
    $region33: #{_forward_impl.2} parent=1 // pred_fallthru
      _
    // Predicated region
    $region34: #{_forward_impl.2} parent=1 // pred_check
      _
    $region35: #{_forward_impl.2} parent=1 // pred_check_branch
      %245 = sbr.rel (0) target = $region37
    $region36: #{_forward_impl.2} parent=1 // pred_region
      _
    $region37: #{_forward_impl.2} parent=1 // pred_fallthru
      _
    %246 = vsyncpa [#allocation4], 1
    %247 = vsyncpa [#allocation6], 1

</llo_original>
